<compile_context>
chip_gen: v5e
topology: v5e:2x2
jax: 0.10.0
libtpu: 0.0.40
codegen_flags: <defaults>
</compile_context>

<pallas_src>
import functools

import jax
import jax.numpy as jnp
from jax import lax
from jax.experimental import pallas as pl
from jax.experimental.pallas import tpu as pltpu

LANES = 128
MAX_TM = 2048  # max row-tile (sublanes) per grid step (~1 MiB f32 per operand)


def _huber_kernel(pred_ref, gt_ref, out_ref, acc_ref, *,
                  rows_valid, inv_n, tm, steps_per_core, needs_mask):
    c = pl.program_id(0)  # megacore "parallel" axis
    i = pl.program_id(1)  # reduction axis ("arbitrary")

    @pl.when(i == 0)
    def _():
        acc_ref[...] = jnp.zeros_like(acc_ref)

    pred = pred_ref[...].astype(jnp.float32)
    gt = gt_ref[...].astype(jnp.float32)

    # mask = (gt > 0); smooth_l1(pred*mask, gt*mask) == smooth_l1 of masked diff
    diff = jnp.where(gt > 0, pred - gt, jnp.float32(0.0))
    ad = jnp.abs(diff)
    loss = jnp.where(ad < 1.0,
                     jnp.float32(0.5) * diff * diff,
                     ad - jnp.float32(0.5))

    if needs_mask:
        # Zero rows past the logical end of the input: covers the ragged tail of
        # the last block and any fully out-of-range (clamped) duplicate block on
        # the second core. Compiled out when tiling divides evenly.
        block_row0 = (c * steps_per_core + i) * tm  # UNclamped logical row offset
        row_idx = block_row0 + lax.broadcasted_iota(jnp.int32, (tm, LANES), 0)
        loss = jnp.where(row_idx < rows_valid, loss, jnp.float32(0.0))

    # Pure elementwise (VPU) accumulate each step; XLU reduce only at the end.
    acc_ref[...] += loss

    @pl.when(i == pl.num_programs(1) - 1)
    def _():
        out_ref[...] = (jnp.sum(acc_ref[...]) * jnp.float32(inv_n)).reshape(1, 1, 1)


def huber_delta1_loss(prediction, gt, input=None):
    """Pallas equivalent of Huber_delta1_loss.forward(prediction, gt, input).

    `input` is unused by the reference module; kept for signature fidelity.
    """
    assert prediction.shape == gt.shape
    n = prediction.size

    # Stream native dtype into the kernel; cast to f32 in-VMEM (free on VPU).
    pred_flat = prediction.reshape(-1)
    gt_flat = gt.reshape(-1)

    rows = pl.cdiv(n, LANES)
    lane_pad = rows * LANES - n
    if lane_pad:
        # Only when numel is not a multiple of 128. gt=0 padding -> zero loss,
        # and the mean divides by the original n, so this is exact.
        pred_flat = jnp.pad(pred_flat, (0, lane_pad))
        gt_flat = jnp.pad(gt_flat, (0, lane_pad))

    pred2d = pred_flat.reshape(rows, LANES)
    gt2d = gt_flat.reshape(rows, LANES)

    # Sublane granularity scales with dtype packing (f32: 8, bf16: 16, int8: 32).
    itemsize = min(pred2d.dtype.itemsize, gt2d.dtype.itemsize)
    gran = 8 * max(1, 4 // int(itemsize))
    tm = min(MAX_TM, gran * pl.cdiv(rows, gran))

    total_steps = pl.cdiv(rows, tm)
    num_cores = 2 if total_steps >= 2 else 1  # v7x megacore split; no-op on 1-TC chips
    steps_per_core = pl.cdiv(total_steps, num_cores)
    max_block = total_steps - 1

    # Masking only needed if the last tile is ragged or the core split leaves a
    # clamped duplicate block on the second core; otherwise compile it out.
    needs_mask = (rows % tm != 0) or (num_cores * steps_per_core != total_steps)

    def in_map(c, i):
        # Clamp so the DMA window never starts past the array end; the kernel
        # masks by the UNclamped logical row index, so clamped duplicates add 0.
        return (jnp.minimum(c * steps_per_core + i, max_block), 0)

    kernel = functools.partial(
        _huber_kernel,
        rows_valid=rows,
        inv_n=1.0 / float(n),
        tm=tm,
        steps_per_core=steps_per_core,
        needs_mask=needs_mask,
    )

    partials = pl.pallas_call(
        kernel,
        out_shape=jax.ShapeDtypeStruct((num_cores, 1, 1), jnp.float32),
        grid_spec=pltpu.PrefetchScalarGridSpec(
            num_scalar_prefetch=0,
            grid=(num_cores, steps_per_core),
            in_specs=[
                pl.BlockSpec((tm, LANES), in_map),
                pl.BlockSpec((tm, LANES), in_map),
            ],
            out_specs=pl.BlockSpec((1, 1, 1), lambda c, i: (c, 0, 0)),
            scratch_shapes=[pltpu.VMEM((tm, LANES), jnp.float32)],
        ),
        compiler_params=pltpu.CompilerParams(
            dimension_semantics=("parallel", "arbitrary"),
        ),
    )(pred2d, gt2d)

    # One partial per core (one entry on single-TC chips); tiny sum in XLA.
    return jnp.sum(partials)


def _ref(prediction, gt):
    p = prediction.astype(jnp.float32)
    g = gt.astype(jnp.float32)
    mask = (g > 0).astype(jnp.float32)
    diff = p * mask - g * mask
    ad = jnp.abs(diff)
    loss = jnp.where(ad < 1.0, 0.5 * diff * diff, ad - 0.5)
    return jnp.mean(loss)


if __name__ == "__main__":
    key = jax.random.PRNGKey(0)
    k1, k2, k3 = jax.random.split(key, 3)

    # Primary test: module-implied NCHW shape.
    shape = (2, 4, 16, 16)
    prediction = jax.random.normal(k1, shape, dtype=jnp.float32)
    gt = jax.random.normal(k2, shape, dtype=jnp.float32)      # mix of +/- so mask matters
    inp = jax.random.normal(k3, shape, dtype=jnp.float32)     # unused by the loss

    out = jax.block_until_ready(huber_delta1_loss(prediction, gt, inp))
    ref = _ref(prediction, gt)
    assert jnp.allclose(out, ref, rtol=1e-5, atol=1e-6), (out, ref)

    # Extra small checks: multi-block + 2-way parallel split, and a ragged tail.
    for extra_shape in [(2, 8, 80, 80), (3, 4, 37, 29), (4, 8, 128, 130)]:
        ka, kb = jax.random.split(jax.random.PRNGKey(hash(extra_shape) % 2**31), 2)
        p2 = jax.random.normal(ka, extra_shape, dtype=jnp.float32)
        g2 = jax.random.normal(kb, extra_shape, dtype=jnp.float32)
        o2 = jax.block_until_ready(huber_delta1_loss(p2, g2))
        r2 = _ref(p2, g2)
        assert jnp.allclose(o2, r2, rtol=1e-5, atol=1e-6), (extra_shape, o2, r2)

    print("KERNEL_OK")
</pallas_src>

<mosaic_0001>
module attributes {stable_mosaic.version = 11 : i64} {
  func.func @_huber_kernel(%arg0: i32, %arg1: i32, %arg2: memref<16x128xf32, #tpu.memory_space<vmem>>, %arg3: memref<16x128xf32, #tpu.memory_space<vmem>>, %arg4: memref<1x1x1xf32, #tpu.memory_space<vmem>>, %arg5: memref<16x128xf32, #tpu.memory_space<vmem>>) attributes {dimension_semantics = [#tpu.dimension_semantics<parallel>, #tpu.dimension_semantics<arbitrary>], iteration_bounds = array<i64: 1, 1>, scalar_prefetch = 0 : i64, scratch_operands = 1 : i64, tpu.core_type = #tpu.core_type<tc>, window_params = [{transform_indices = @transform_0, window_bounds = array<i64: 16, 128>}, {transform_indices = @transform_1, window_bounds = array<i64: 16, 128>}, {transform_indices = @transform_2, window_bounds = array<i64: 1, 1, 1>}]} {
    %c0_i32 = arith.constant 0 : i32
    %0 = arith.cmpi eq, %arg1, %c0_i32 : i32
    %1 = arith.extui %0 : i1 to i32
    %c0_i32_0 = arith.constant 0 : i32
    %2 = arith.cmpi ne, %1, %c0_i32_0 : i32
    scf.if %2 {
      %cst_14 = arith.constant 0.000000e+00 : f32
      %25 = vector.broadcast %cst_14 : f32 to vector<16x128xf32>
      %c0_15 = arith.constant 0 : index
      %c0_16 = arith.constant 0 : index
      %26 = vector.load %arg5[%c0_15, %c0_16] : memref<16x128xf32, #tpu.memory_space<vmem>>, vector<16x128xf32>
      tpu.vector_store %arg5[%c0_15, %c0_16], %25 {strides = array<i32>} : memref<16x128xf32, #tpu.memory_space<vmem>>, vector<16x128xf32>,
    } else {
    }
    %c0 = arith.constant 0 : index
    %c0_1 = arith.constant 0 : index
    %3 = vector.load %arg2[%c0, %c0_1] : memref<16x128xf32, #tpu.memory_space<vmem>>, vector<16x128xf32>
    %c0_2 = arith.constant 0 : index
    %c0_3 = arith.constant 0 : index
    %4 = vector.load %arg3[%c0_2, %c0_3] : memref<16x128xf32, #tpu.memory_space<vmem>>, vector<16x128xf32>
    %cst = arith.constant 0.000000e+00 : f32
    %5 = vector.broadcast %cst : f32 to vector<16x128xf32>
    %6 = arith.cmpf ogt, %4, %5 : vector<16x128xf32>
    %7 = arith.subf %3, %4 : vector<16x128xf32>
    %cst_4 = arith.constant 0.000000e+00 : f32
    %8 = vector.broadcast %cst_4 : f32 to vector<16x128xf32>
    %9 = arith.select %6, %7, %8 : vector<16x128xi1>, vector<16x128xf32>
    %10 = math.absf %9 : vector<16x128xf32>
    %cst_5 = arith.constant 1.000000e+00 : f32
    %11 = vector.broadcast %cst_5 : f32 to vector<16x128xf32>
    %12 = arith.cmpf olt, %10, %11 : vector<16x128xf32>
    %cst_6 = arith.constant 5.000000e-01 : f32
    %13 = vector.broadcast %cst_6 : f32 to vector<16x128xf32>
    %14 = arith.mulf %13, %9 : vector<16x128xf32>
    %15 = arith.mulf %14, %9 : vector<16x128xf32>
    %cst_7 = arith.constant 5.000000e-01 : f32
    %16 = vector.broadcast %cst_7 : f32 to vector<16x128xf32>
    %17 = arith.subf %10, %16 : vector<16x128xf32>
    %18 = arith.select %12, %15, %17 : vector<16x128xi1>, vector<16x128xf32>
    %c0_8 = arith.constant 0 : index
    %c0_9 = arith.constant 0 : index
    %19 = vector.load %arg5[%c0_8, %c0_9] : memref<16x128xf32, #tpu.memory_space<vmem>>, vector<16x128xf32>
    %20 = arith.addf %19, %18 : vector<16x128xf32>
    %c0_10 = arith.constant 0 : index
    %c0_11 = arith.constant 0 : index
    %21 = vector.load %arg5[%c0_10, %c0_11] : memref<16x128xf32, #tpu.memory_space<vmem>>, vector<16x128xf32>
    tpu.vector_store %arg5[%c0_10, %c0_11], %20 {strides = array<i32>} : memref<16x128xf32, #tpu.memory_space<vmem>>, vector<16x128xf32>,
    %c0_i32_12 = arith.constant 0 : i32
    %22 = arith.cmpi eq, %arg1, %c0_i32_12 : i32
    %23 = arith.extui %22 : i1 to i32
    %c0_i32_13 = arith.constant 0 : i32
    %24 = arith.cmpi ne, %23, %c0_i32_13 : i32
    scf.if %24 {
      %c0_14 = arith.constant 0 : index
      %c0_15 = arith.constant 0 : index
      %25 = vector.load %arg5[%c0_14, %c0_15] : memref<16x128xf32, #tpu.memory_space<vmem>>, vector<16x128xf32>
      %26 = vector.shape_cast %25 : vector<16x128xf32> to vector<1x16x128xf32>
      %cst_16 = arith.constant dense<0.000000e+00> : vector<1xf32>
      %27 = vector.multi_reduction <add>, %26, %cst_16 [1, 2] : vector<1x16x128xf32> to vector<1xf32>
      %28 = vector.shape_cast %27 : vector<1xf32> to vector<1x1x1xf32>
      %29 = vector.extract %28[0, 0, 0] : f32 from vector<1x1x1xf32>
      %cst_17 = arith.constant 4.8828125E-4 : f32
      %30 = arith.mulf %29, %cst_17 : f32
      %31 = vector.broadcast %30 : f32 to vector<1x1x1xf32>
      %c0_18 = arith.constant 0 : index
      %c0_19 = arith.constant 0 : index
      %c0_20 = arith.constant 0 : index
      %32 = vector.load %arg4[%c0_18, %c0_19, %c0_20] : memref<1x1x1xf32, #tpu.memory_space<vmem>>, vector<1x1x1xf32>
      tpu.vector_store %arg4[%c0_18, %c0_19, %c0_20], %31 {strides = array<i32>} : memref<1x1x1xf32, #tpu.memory_space<vmem>>, vector<1x1x1xf32>,
    } else {
    }
    return
  }
  func.func @transform_0(%arg0: i32, %arg1: i32) -> (i32, i32) {
    %c1_i32 = arith.constant 1 : i32
    %0 = arith.muli %arg0, %c1_i32 : i32
    %1 = arith.addi %0, %arg1 : i32
    %c0_i32 = arith.constant 0 : i32
    %2 = arith.minsi %1, %c0_i32 : i32
    %c0_i32_0 = arith.constant 0 : i32
    %c0_i32_1 = arith.constant 0 : i32
    return %2, %c0_i32_0 : i32, i32
  }
  func.func @transform_1(%arg0: i32, %arg1: i32) -> (i32, i32) {
    %c1_i32 = arith.constant 1 : i32
    %0 = arith.muli %arg0, %c1_i32 : i32
    %1 = arith.addi %0, %arg1 : i32
    %c0_i32 = arith.constant 0 : i32
    %2 = arith.minsi %1, %c0_i32 : i32
    %c0_i32_0 = arith.constant 0 : i32
    %c0_i32_1 = arith.constant 0 : i32
    return %2, %c0_i32_0 : i32, i32
  }
  func.func @transform_2(%arg0: i32, %arg1: i32) -> (i32, i32, i32) {
    %c0_i32 = arith.constant 0 : i32
    %c0_i32_0 = arith.constant 0 : i32
    %c0_i32_1 = arith.constant 0 : i32
    return %arg0, %c0_i32, %c0_i32_0 : i32, i32, i32
  }
}

</mosaic_0001>

<llo_original>
// kernel: tpu_custom_call.1
$region0: #{tpu_custom_call.1}
  #allocation0 [shape = 'u32[]', space=smem, size = 0x4, offset = 0x4, fixed_abs, tag = 'smem constant byte address 0x4 - core index']
  #allocation1 [shape = 'u32[72,128]{1,0:T(1,128)}', space=vmem, size = 0x9000, scoped, tag = 'internal scratch']
  #allocation2 [shape = 'f32[16,128]{1,0:T(8,128)}', space=vmem, size = 0x2000, scoped, tag = 'scratch operand']
  %s0 = inlined_call_operand.hbm [shape: f32[16,128], index: 0, kind: input, shape index: {}]
  %s1 = inlined_call_operand.hbm [shape: f32[16,128], index: 1, kind: input, shape index: {}]
  %s2 = inlined_call_operand.hbm [shape: f32[1,1,1], index: 2, kind: output, shape index: {}]
  %s3 = sld [smem:[#allocation0]]
  $region34: #{tpu_custom_call.1} parent=0
    _
  %s5 = ssub.s32 1, %s3
  %s6 = scalar_select 0, %s5, %s3
  $region1: #{tpu_custom_call.1} parent=0
    #allocation3 [shape = 'u8[8192]{0}', space=vmem, size = 0x2000, scoped, tag = 'input window, operand 0, single buffered']
    #allocation4 [shape = 's32[1]{0}', space=sflag, size = 0x4, scoped, tag = 'scoped memory for tpu_custom_call.1']
    #allocation5 [shape = 's32[1]{0}', space=sflag, size = 0x4, scoped, tag = 'scoped memory for tpu_custom_call.1']
    #allocation6 [shape = 'u8[8192]{0}', space=vmem, size = 0x2000, scoped, tag = 'input window, operand 1, single buffered']
    #allocation7 [shape = 's32[1]{0}', space=sflag, size = 0x4, scoped, tag = 'scoped memory for tpu_custom_call.1']
    #allocation8 [shape = 'u8[512]{0}', space=vmem, size = 0x400, scoped, tag = 'output window, operand 0, single buffered']
    %7 = vsyncpa [#allocation4], 0
    %8 = vsyncpa [#allocation7], 0
    %9 = vsyncpa [#allocation5], 0
    // Predicated region
    $region2: #{tpu_custom_call.1} parent=1 // pred_check
      _
    $region3: #{tpu_custom_call.1} parent=1 // pred_check_branch
      %11 = sbr.rel (0) target = $region5
    $region4: #{tpu_custom_call.1} parent=1 // pred_region
      %s12 = sadd.s32 0, 0
      %p13 = scmp.lt.s32.totalorder %s12, 0
      %s14 = scalar_select %p13, %s12, 0
      %s15 = smul.u32 2, %s14
      %17 = vsyncadd [#allocation4], 0
      %s18 = smul.addr %s15, 8
      %s19 = scalar_lea.hbm %s0, %s18
      %s20 = sshll.u32 %s19, 4
      %s21 = int_to_ptr.hbm [resolvable:$true] %s20
      %s22 = sshll.u32 [#allocation3], 4
      %s23 = int_to_ptr.vmem [resolvable:$true] %s22
      %28 = dma.hbm_to_vmem [thread:$0]  %s21, 256, %s23, [#allocation4], 128, 128, 8
    $region5: #{tpu_custom_call.1} parent=1 // pred_fallthru
      _
    // Predicated region
    $region6: #{tpu_custom_call.1} parent=1 // pred_check
      _
    $region7: #{tpu_custom_call.1} parent=1 // pred_check_branch
      %30 = sbr.rel (0) target = $region9
    $region8: #{tpu_custom_call.1} parent=1 // pred_region
      %s31 = sadd.s32 0, 0
      %p32 = scmp.lt.s32.totalorder %s31, 0
      %s33 = scalar_select %p32, %s31, 0
      %s34 = smul.u32 2, %s33
      %36 = vsyncadd [#allocation7], 0
      %s37 = smul.addr %s34, 8
      %s38 = scalar_lea.hbm %s1, %s37
      %s39 = sshll.u32 %s38, 4
      %s40 = int_to_ptr.hbm [resolvable:$true] %s39
      %s41 = sshll.u32 [#allocation6], 4
      %s42 = int_to_ptr.vmem [resolvable:$true] %s41
      %47 = dma.hbm_to_vmem [thread:$0]  %s40, 256, %s42, [#allocation7], 128, 128, 8
    $region9: #{tpu_custom_call.1} parent=1 // pred_fallthru
      _
    // Predicated region
    $region10: #{tpu_custom_call.1} parent=1 // pred_check
      _
    $region11: #{tpu_custom_call.1} parent=1 // pred_check_branch
      %49 = sbr.rel (0) target = $region13
    $region12: #{tpu_custom_call.1} parent=1 // pred_region
      %51 = dma.done [#allocation4], 256
    $region13: #{tpu_custom_call.1} parent=1 // pred_fallthru
      _
    // Predicated region
    $region14: #{tpu_custom_call.1} parent=1 // pred_check
      _
    $region15: #{tpu_custom_call.1} parent=1 // pred_check_branch
      %53 = sbr.rel (0) target = $region17
    $region16: #{tpu_custom_call.1} parent=1 // pred_region
      %55 = dma.done [#allocation7], 256
    $region17: #{tpu_custom_call.1} parent=1 // pred_fallthru
      _
    %s56 = sadd.s32 0, 0
    %p57 = scmp.lt.s32.totalorder %s56, 0
    %s58 = scalar_select %p57, %s56, 0
    %s59 = smul.u32 2, %s58
    %s60 = sadd.s32 0, 0
    %p61 = scmp.lt.s32.totalorder %s60, 0
    %s62 = scalar_select %p61, %s60, 0
    %s63 = smul.u32 2, %s62
    %p64 = scmp.eq.s32.totalorder 0, 0
    // Predicated region
    $region18: #{tpu_custom_call.1} parent=1 // pred_check
      %p65 = pneg %p64
    $region19: #{tpu_custom_call.1} parent=1 // pred_check_branch
      %67 = sbr.rel (%p65) target = $region21
    $region20: #{tpu_custom_call.1} parent=1 // pred_region
      %68 = vst [vmem:[#allocation2] sm:$0xff] 0.0
      %69 = vst [vmem:[#allocation2 + $0x8] sm:$0xff] 0.0
    $region21: #{tpu_custom_call.1} parent=1 // pred_fallthru
      _
    %v70 = vld [vmem:[#allocation3] sm:$0xff]
    %v71 = vld [vmem:[#allocation3 + $0x8] sm:$0xff]
    %v72 = vld [vmem:[#allocation6] sm:$0xff]
    %v73 = vld [vmem:[#allocation6 + $0x8] sm:$0xff]
    %vm74 = vcmp.gt.f32.partialorder %v72, 0.0
    %vm75 = vcmp.gt.f32.partialorder %v73, 0.0
    %v76 = vsub.f32 %v70, %v72
    %v77 = vsub.f32 %v71, %v73
    %v78 = vsel %vm74, %v76, 0.0
    %v79 = vsel %vm75, %v77, 0.0
    %v80 = vand.u32 2147483647, %v78
    %v81 = vand.u32 2147483647, %v79
    %vm82 = vcmp.lt.f32.partialorder %v80, 1.0
    %vm83 = vcmp.lt.f32.partialorder %v81, 1.0
    %v84 = vmul.f32 %v78, 0.5
    %v85 = vmul.f32 %v79, 0.5
    %v86 = vmul.f32 %v84, %v78
    %v87 = vmul.f32 %v85, %v79
    %v88 = vsub.f32 %v80, 0.5
    %v89 = vsub.f32 %v81, 0.5
    %v90 = vsel %vm82, %v86, %v88
    %v91 = vsel %vm83, %v87, %v89
    %v92 = vld [vmem:[#allocation2] sm:$0xff]
    %v93 = vld [vmem:[#allocation2 + $0x8] sm:$0xff]
    %v94 = vadd.f32 %v92, %v90
    %v95 = vadd.f32 %v93, %v91
    %96 = vst [vmem:[#allocation2] sm:$0xff] %v94
    %97 = vst [vmem:[#allocation2 + $0x8] sm:$0xff] %v95
    // Predicated region
    $region22: #{tpu_custom_call.1} parent=1 // pred_check
      %p98 = pneg %p64
    $region23: #{tpu_custom_call.1} parent=1 // pred_check_branch
      %100 = sbr.rel (%p98) target = $region25
    $region24: #{tpu_custom_call.1} parent=1 // pred_region
      %v101 = vld [vmem:[#allocation2] sm:$0xff]
      %v102 = vld [vmem:[#allocation2 + $0x8] sm:$0xff]
      %v103 = vadd.f32 %v101, %v102
      %104 = vadd.xlane.f32.xlu0 %v103
      %v105 = vpop.xlane.xlu0 %104
      %v106 = vrot.slane %v105, 4
      %v107 = vadd.f32 %v105, %v106
      %v108 = vrot.slane %v107, 2
      %v109 = vadd.f32 %v107, %v108
      %v110 = vrot.slane %v109, 1
      %v111 = vadd.f32 %v109, %v110
      %s112 = vtos %v111
      %s113 = smul.f32 %s112, 0.00048828125
      %v114 = vstv %s113
      %vm115 = vcmask 0
      %116 = vst.msk [vmem:[#allocation8] sm:$0x1] %vm115, %v114
    $region25: #{tpu_custom_call.1} parent=1 // pred_fallthru
      _
    // Predicated region
    $region26: #{tpu_custom_call.1} parent=1 // pred_check
      _
    $region27: #{tpu_custom_call.1} parent=1 // pred_check_branch
      %118 = sbr.rel (0) target = $region29
    $region28: #{tpu_custom_call.1} parent=1 // pred_region
      %120 = vsyncadd [#allocation5], 0
      %s122 = sshll.u32 [#allocation8], 4
      %s123 = int_to_ptr.vmem [resolvable:$true] %s122
      %s124 = sshll.u32 %s2, 4
      %s125 = int_to_ptr.hbm [resolvable:$true] %s124
      %127 = dma.vmem_to_hbm [thread:$0]  %s123, 16, %s125, [#allocation5]
    $region29: #{tpu_custom_call.1} parent=1 // pred_fallthru
      _
    // Predicated region
    $region30: #{tpu_custom_call.1} parent=1 // pred_check
      _
    $region31: #{tpu_custom_call.1} parent=1 // pred_check_branch
      %129 = sbr.rel (0) target = $region33
    $region32: #{tpu_custom_call.1} parent=1 // pred_region
      %131 = dma.done [#allocation5], 16
    $region33: #{tpu_custom_call.1} parent=1 // pred_fallthru
      _
    %132 = vsyncpa [#allocation4], 1
    %133 = vsyncpa [#allocation7], 1
    %134 = vsyncpa [#allocation5], 1

</llo_original>
